<compile_context>
chip_gen: v5e
topology: v5e:2x2
jax: 0.10.0
libtpu: 0.0.40
codegen_flags: <defaults>
</compile_context>

<pallas_src>
import jax
import jax.numpy as jnp
from jax import lax
from jax.experimental import pallas as pl
from jax.experimental.pallas import tpu as pltpu

_CHUNK = 256            # rows processed per inner compute step
_MAX_BLOCK = 4096       # max rows per grid step (DMA tile)
_PAD = 128              # padded hidden / compute width (lane-aligned)


def _round_up(n, m):
    return ((n + m - 1) // m) * m


def _mlp_kernel(x_ref, w1_ref, b1_ref, w2_ref, b2_ref, w3_ref, b3_ref, o_ref):
    # Resident weights / biases (hoisted out of the row-chunk loop).
    w1 = w1_ref[...]          # (3, 128)   f32
    b1 = b1_ref[...]          # (1, 128)   f32
    w2 = w2_ref[...]          # (128, 128) bf16
    b2 = b2_ref[...]          # (1, 128)   f32
    w3 = w3_ref[...]          # (128, 128) bf16
    b3 = b3_ref[...]          # (1, 128)   f32

    out_f = o_ref.shape[1]                    # 11: narrow HBM output
    n_chunks = x_ref.shape[0] // _CHUNK

    def body(c, carry):
        r0 = pl.multiple_of(c * _CHUNK, _CHUNK)
        x = x_ref[pl.ds(r0, _CHUNK), :]                      # (CHUNK, 3)

        # fc1: K=3 is far below the MXU's minimum K tile -> 3 VPU broadcast-FMAs.
        h1 = (x[:, 0:1] * w1[0:1, :]
              + x[:, 1:2] * w1[1:2, :]
              + x[:, 2:3] * w1[2:3, :]
              + b1)
        h1 = jnp.maximum(h1, 0.0)                            # (CHUNK, 128) f32

        # fc2 + ReLU: bf16 MXU operands, f32 accumulation.
        h2 = jnp.dot(h1.astype(jnp.bfloat16), w2,
                     preferred_element_type=jnp.float32) + b2
        h2 = jnp.maximum(h2, 0.0)                            # (CHUNK, 128) f32

        # fc3 (no activation): bf16 MXU operands, f32 accumulation.
        out = jnp.dot(h2.astype(jnp.bfloat16), w3,
                      preferred_element_type=jnp.float32) + b3

        # Only the first out_f (=11) lanes go to HBM; padded lanes never leave VMEM.
        o_ref[pl.ds(r0, _CHUNK), :] = out[:, :out_f].astype(o_ref.dtype)
        return carry

    lax.fori_loop(0, n_chunks, body, 0, unroll=True)


def _pad_params(params):
    """Zero-pad hidden widths to 128; pre-cast the MXU weights to bf16."""
    w1, b1 = params["w1"], params["b1"]        # (3, 100), (1, 100)
    w2, b2 = params["w2"], params["b2"]        # (100, 100), (1, 100)
    w3, b3 = params["w3"], params["b3"]        # (100, 11), (1, 11)
    h = w1.shape[1]
    o = w3.shape[1]
    dh, do = _PAD - h, _PAD - o
    w1p = jnp.pad(w1, ((0, 0), (0, dh)))
    b1p = jnp.pad(b1, ((0, 0), (0, dh)))
    w2p = jnp.pad(w2, ((0, dh), (0, dh))).astype(jnp.bfloat16)
    b2p = jnp.pad(b2, ((0, 0), (0, dh)))
    w3p = jnp.pad(w3, ((0, dh), (0, do))).astype(jnp.bfloat16)
    b3p = jnp.pad(b3, ((0, 0), (0, do)))
    return w1p, b1p, w2p, b2p, w3p, b3p


def extinction_nn_forward(x, params):
    """x: (B, 3) float32.  params: dict with w1,b1,w2,b2,w3,b3 (unpadded)."""
    B = x.shape[0]
    in_f = x.shape[1]                      # 3
    out_f = params["w3"].shape[1]          # 11

    w1p, b1p, w2p, b2p, w3p, b3p = _pad_params(params)

    # Batch tiling in _CHUNK-row units:
    #   * cap at _MAX_BLOCK rows per grid step,
    #   * force >= 2 grid steps when possible (v7x megacore sharding),
    #   * rebalance chunks-per-tile so the final tile wastes minimal padding.
    n_chunks = max(1, pl.cdiv(B, _CHUNK))
    max_cpt = _MAX_BLOCK // _CHUNK
    cpt = min(max_cpt, n_chunks)
    if n_chunks >= 2:
        cpt = min(cpt, pl.cdiv(n_chunks, 2))
    g = pl.cdiv(n_chunks, cpt)
    cpt = pl.cdiv(n_chunks, g)
    tb = cpt * _CHUNK
    b_pad = g * tb
    x_pad = jnp.pad(x, ((0, b_pad - B), (0, 0)))
    grid = (g,)

    weight_bytes = (4 * (w1p.size + b1p.size + b2p.size + b3p.size)
                    + 2 * (w2p.size + w3p.size))
    cost = pl.CostEstimate(
        flops=2 * b_pad * (in_f * _PAD + _PAD * _PAD + _PAD * _PAD),
        transcendentals=0,
        bytes_accessed=b_pad * (in_f + out_f) * 4 + weight_bytes,
    )

    resident = lambda shape: pl.BlockSpec(shape, lambda i: (0, 0))

    out = pl.pallas_call(
        _mlp_kernel,
        out_shape=jax.ShapeDtypeStruct((b_pad, out_f), jnp.float32),
        grid=grid,
        in_specs=[
            pl.BlockSpec((tb, in_f), lambda i: (i, 0)),     # x tile
            resident((in_f, _PAD)),                         # w1
            resident((1, _PAD)),                            # b1
            resident((_PAD, _PAD)),                         # w2 (bf16)
            resident((1, _PAD)),                            # b2
            resident((_PAD, _PAD)),                         # w3 (bf16)
            resident((1, _PAD)),                            # b3
        ],
        out_specs=pl.BlockSpec((tb, out_f), lambda i: (i, 0)),
        compiler_params=pltpu.CompilerParams(
            dimension_semantics=("parallel",),
            vmem_limit_bytes=32 * 1024 * 1024,
        ),
        cost_estimate=cost,
    )(x_pad, w1p, b1p, w2p, b2p, w3p, b3p)

    return out[:B]


def init_params(key):
    """nn.Linear-shaped params: fc1(3->100), fc2(100->100), fc3(100->11).

    Weights stored transposed as (in, out) for the x @ W layout; biases (1, out)."""
    ks = jax.random.split(key, 6)

    def linear(kw, kb, fan_in, fan_out):
        bound = 1.0 / jnp.sqrt(fan_in)
        w = jax.random.uniform(kw, (fan_in, fan_out), jnp.float32, -bound, bound)
        b = jax.random.uniform(kb, (1, fan_out), jnp.float32, -bound, bound)
        return w, b

    w1, b1 = linear(ks[0], ks[1], 3, 100)
    w2, b2 = linear(ks[2], ks[3], 100, 100)
    w3, b3 = linear(ks[4], ks[5], 100, 11)
    return dict(w1=w1, b1=b1, w2=w2, b2=b2, w3=w3, b3=b3)


def _reference(x, params):
    ref = jnp.maximum(x @ params["w1"] + params["b1"], 0.0)
    ref = jnp.maximum(ref @ params["w2"] + params["b2"], 0.0)
    return ref @ params["w3"] + params["b3"]


if __name__ == "__main__":
    key = jax.random.PRNGKey(0)
    k_params, k_x1, k_x2 = jax.random.split(key, 3)

    params = init_params(k_params)

    # Small batch (single grid step).
    x_small = jax.random.normal(k_x1, (8, 3), dtype=jnp.float32)  # (A0, GK, RPK)
    out_small = jax.block_until_ready(extinction_nn_forward(x_small, params))
    assert out_small.shape == (8, 11)
    # bf16 MXU operands => compare against the f32 reference at loose tolerance.
    assert jnp.allclose(out_small, _reference(x_small, params), atol=2e-2, rtol=2e-2)

    # Larger batch: exercises >=2 grid steps + batch padding.
    x_big = jax.random.normal(k_x2, (600, 3), dtype=jnp.float32)
    out_big = jax.block_until_ready(extinction_nn_forward(x_big, params))
    assert out_big.shape == (600, 11)
    assert jnp.allclose(out_big, _reference(x_big, params), atol=2e-2, rtol=2e-2)

    print("KERNEL_OK")
</pallas_src>

<mosaic_0001>
module attributes {stable_mosaic.version = 11 : i64} {
  func.func @_mlp_kernel(%arg0: i32, %arg1: memref<256x3xf32, #tpu.memory_space<vmem>>, %arg2: memref<3x128xf32, #tpu.memory_space<vmem>>, %arg3: memref<1x128xf32, #tpu.memory_space<vmem>>, %arg4: memref<128x128xbf16, #tpu.memory_space<vmem>>, %arg5: memref<1x128xf32, #tpu.memory_space<vmem>>, %arg6: memref<128x128xbf16, #tpu.memory_space<vmem>>, %arg7: memref<1x128xf32, #tpu.memory_space<vmem>>, %arg8: memref<256x11xf32, #tpu.memory_space<vmem>>) attributes {dimension_semantics = [#tpu.dimension_semantics<parallel>], iteration_bounds = array<i64: 1>, scalar_prefetch = 0 : i64, scratch_operands = 0 : i64, tpu.core_type = #tpu.core_type<tc>, window_params = [{transform_indices = @transform_0, window_bounds = array<i64: 256, 3>}, {pipeline_mode = #tpu.pipeline_mode<synchronous>, transform_indices = @transform_1, window_bounds = array<i64: 3, 128>}, {pipeline_mode = #tpu.pipeline_mode<synchronous>, transform_indices = @transform_2, window_bounds = array<i64: 1, 128>}, {pipeline_mode = #tpu.pipeline_mode<synchronous>, transform_indices = @transform_3, window_bounds = array<i64: 128, 128>}, {pipeline_mode = #tpu.pipeline_mode<synchronous>, transform_indices = @transform_4, window_bounds = array<i64: 1, 128>}, {pipeline_mode = #tpu.pipeline_mode<synchronous>, transform_indices = @transform_5, window_bounds = array<i64: 128, 128>}, {pipeline_mode = #tpu.pipeline_mode<synchronous>, transform_indices = @transform_6, window_bounds = array<i64: 1, 128>}, {transform_indices = @transform_7, window_bounds = array<i64: 256, 11>}]} {
    %c0 = arith.constant 0 : index
    %c0_0 = arith.constant 0 : index
    %0 = vector.load %arg2[%c0, %c0_0] : memref<3x128xf32, #tpu.memory_space<vmem>>, vector<3x128xf32>
    %c0_1 = arith.constant 0 : index
    %c0_2 = arith.constant 0 : index
    %1 = vector.load %arg3[%c0_1, %c0_2] : memref<1x128xf32, #tpu.memory_space<vmem>>, vector<1x128xf32>
    %c0_3 = arith.constant 0 : index
    %c0_4 = arith.constant 0 : index
    %2 = vector.load %arg4[%c0_3, %c0_4] : memref<128x128xbf16, #tpu.memory_space<vmem>>, vector<128x128xbf16>
    %c0_5 = arith.constant 0 : index
    %c0_6 = arith.constant 0 : index
    %3 = vector.load %arg5[%c0_5, %c0_6] : memref<1x128xf32, #tpu.memory_space<vmem>>, vector<1x128xf32>
    %c0_7 = arith.constant 0 : index
    %c0_8 = arith.constant 0 : index
    %4 = vector.load %arg6[%c0_7, %c0_8] : memref<128x128xbf16, #tpu.memory_space<vmem>>, vector<128x128xbf16>
    %c0_9 = arith.constant 0 : index
    %c0_10 = arith.constant 0 : index
    %5 = vector.load %arg7[%c0_9, %c0_10] : memref<1x128xf32, #tpu.memory_space<vmem>>, vector<1x128xf32>
    %c0_i32 = arith.constant 0 : i32
    %c256_i32 = arith.constant 256 : i32
    %6 = arith.muli %c0_i32, %c256_i32 : i32
    %7 = tpu.assume_multiple %6, 256 : i32
    %8 = arith.index_cast %7 : i32 to index
    %c0_11 = arith.constant 0 : index
    %9 = vector.load %arg1[%8, %c0_11] : memref<256x3xf32, #tpu.memory_space<vmem>>, vector<256x3xf32>
    %10 = vector.extract_strided_slice %9 {offsets = [0, 0], sizes = [256, 1], strides = [1, 1]} : vector<256x3xf32> to vector<256x1xf32>
    %11 = vector.extract_strided_slice %0 {offsets = [0, 0], sizes = [1, 128], strides = [1, 1]} : vector<3x128xf32> to vector<1x128xf32>
    %12 = vector.broadcast %10 : vector<256x1xf32> to vector<256x128xf32>
    %13 = vector.broadcast %11 : vector<1x128xf32> to vector<256x128xf32>
    %14 = arith.mulf %12, %13 : vector<256x128xf32>
    %15 = vector.extract_strided_slice %9 {offsets = [0, 1], sizes = [256, 1], strides = [1, 1]} : vector<256x3xf32> to vector<256x1xf32>
    %16 = vector.extract_strided_slice %0 {offsets = [1, 0], sizes = [1, 128], strides = [1, 1]} : vector<3x128xf32> to vector<1x128xf32>
    %17 = vector.broadcast %15 : vector<256x1xf32> to vector<256x128xf32>
    %18 = vector.broadcast %16 : vector<1x128xf32> to vector<256x128xf32>
    %19 = arith.mulf %17, %18 : vector<256x128xf32>
    %20 = arith.addf %14, %19 : vector<256x128xf32>
    %21 = vector.extract_strided_slice %9 {offsets = [0, 2], sizes = [256, 1], strides = [1, 1]} : vector<256x3xf32> to vector<256x1xf32>
    %22 = vector.extract_strided_slice %0 {offsets = [2, 0], sizes = [1, 128], strides = [1, 1]} : vector<3x128xf32> to vector<1x128xf32>
    %23 = vector.broadcast %21 : vector<256x1xf32> to vector<256x128xf32>
    %24 = vector.broadcast %22 : vector<1x128xf32> to vector<256x128xf32>
    %25 = arith.mulf %23, %24 : vector<256x128xf32>
    %26 = arith.addf %20, %25 : vector<256x128xf32>
    %27 = vector.broadcast %1 : vector<1x128xf32> to vector<256x128xf32>
    %28 = arith.addf %26, %27 : vector<256x128xf32>
    %cst = arith.constant 0.000000e+00 : f32
    %29 = vector.broadcast %cst : f32 to vector<256x128xf32>
    %30 = arith.maximumf %28, %29 : vector<256x128xf32>
    %31 = arith.truncf %30 : vector<256x128xf32> to vector<256x128xbf16>
    %cst_12 = arith.constant dense<0.000000e+00> : vector<256x128xf32>
    %32 = tpu.matmul %31, %2, %cst_12 {dimension_numbers = #tpu.dot_dimension_numbers<[1], [0], [0], [1], [0, 0, 1, 1], [], []>} : vector<256x128xbf16>, vector<128x128xbf16>, vector<256x128xf32> -> vector<256x128xf32>
    %33 = vector.broadcast %3 : vector<1x128xf32> to vector<256x128xf32>
    %34 = arith.addf %32, %33 : vector<256x128xf32>
    %cst_13 = arith.constant 0.000000e+00 : f32
    %35 = vector.broadcast %cst_13 : f32 to vector<256x128xf32>
    %36 = arith.maximumf %34, %35 : vector<256x128xf32>
    %37 = arith.truncf %36 : vector<256x128xf32> to vector<256x128xbf16>
    %cst_14 = arith.constant dense<0.000000e+00> : vector<256x128xf32>
    %38 = tpu.matmul %37, %4, %cst_14 {dimension_numbers = #tpu.dot_dimension_numbers<[1], [0], [0], [1], [0, 0, 1, 1], [], []>} : vector<256x128xbf16>, vector<128x128xbf16>, vector<256x128xf32> -> vector<256x128xf32>
    %39 = vector.broadcast %5 : vector<1x128xf32> to vector<256x128xf32>
    %40 = arith.addf %38, %39 : vector<256x128xf32>
    %41 = vector.extract_strided_slice %40 {offsets = [0, 0], sizes = [256, 11], strides = [1, 1]} : vector<256x128xf32> to vector<256x11xf32>
    %42 = arith.index_cast %7 : i32 to index
    %c0_15 = arith.constant 0 : index
    %43 = vector.load %arg8[%42, %c0_15] : memref<256x11xf32, #tpu.memory_space<vmem>>, vector<256x11xf32>
    tpu.vector_store %arg8[%42, %c0_15], %41 {strides = array<i32>} : memref<256x11xf32, #tpu.memory_space<vmem>>, vector<256x11xf32>,
    %c1_i32 = arith.constant 1 : i32
    return
  }
  func.func @transform_0(%arg0: i32) -> (i32, i32) {
    %c0_i32 = arith.constant 0 : i32
    %c0_i32_0 = arith.constant 0 : i32
    return %arg0, %c0_i32 : i32, i32
  }
  func.func @transform_1(%arg0: i32) -> (i32, i32) {
    %c0_i32 = arith.constant 0 : i32
    %c0_i32_0 = arith.constant 0 : i32
    %c0_i32_1 = arith.constant 0 : i32
    return %c0_i32, %c0_i32_0 : i32, i32
  }
  func.func @transform_2(%arg0: i32) -> (i32, i32) {
    %c0_i32 = arith.constant 0 : i32
    %c0_i32_0 = arith.constant 0 : i32
    %c0_i32_1 = arith.constant 0 : i32
    return %c0_i32, %c0_i32_0 : i32, i32
  }
  func.func @transform_3(%arg0: i32) -> (i32, i32) {
    %c0_i32 = arith.constant 0 : i32
    %c0_i32_0 = arith.constant 0 : i32
    %c0_i32_1 = arith.constant 0 : i32
    return %c0_i32, %c0_i32_0 : i32, i32
  }
  func.func @transform_4(%arg0: i32) -> (i32, i32) {
    %c0_i32 = arith.constant 0 : i32
    %c0_i32_0 = arith.constant 0 : i32
    %c0_i32_1 = arith.constant 0 : i32
    return %c0_i32, %c0_i32_0 : i32, i32
  }
  func.func @transform_5(%arg0: i32) -> (i32, i32) {
    %c0_i32 = arith.constant 0 : i32
    %c0_i32_0 = arith.constant 0 : i32
    %c0_i32_1 = arith.constant 0 : i32
    return %c0_i32, %c0_i32_0 : i32, i32
  }
  func.func @transform_6(%arg0: i32) -> (i32, i32) {
    %c0_i32 = arith.constant 0 : i32
    %c0_i32_0 = arith.constant 0 : i32
    %c0_i32_1 = arith.constant 0 : i32
    return %c0_i32, %c0_i32_0 : i32, i32
  }
  func.func @transform_7(%arg0: i32) -> (i32, i32) {
    %c0_i32 = arith.constant 0 : i32
    %c0_i32_0 = arith.constant 0 : i32
    return %arg0, %c0_i32 : i32, i32
  }
}

</mosaic_0001>

<llo_original>
// kernel: tpu_custom_call.1
$region0: #{tpu_custom_call.1}
  #allocation0 [shape = 'u32[]', space=smem, size = 0x4, offset = 0x4, fixed_abs, tag = 'smem constant byte address 0x4 - core index']
  #allocation1 [shape = 'u32[72,128]{1,0:T(1,128)}', space=vmem, size = 0x9000, scoped, tag = 'internal scratch']
  %s0 = inlined_call_operand.vmem [shape: f32[256,3], index: 0, kind: input, shape index: {}]
  %s1 = inlined_call_operand.vmem [shape: f32[3,128], index: 1, kind: input, shape index: {}]
  %s2 = inlined_call_operand.vmem [shape: f32[1,128], index: 2, kind: input, shape index: {}]
  %s3 = inlined_call_operand.vmem [shape: bf16[128,128], index: 3, kind: input, shape index: {}]
  %s4 = inlined_call_operand.vmem [shape: f32[1,128], index: 4, kind: input, shape index: {}]
  %s5 = inlined_call_operand.vmem [shape: bf16[128,128], index: 5, kind: input, shape index: {}]
  %s6 = inlined_call_operand.vmem [shape: f32[1,128], index: 6, kind: input, shape index: {}]
  %s7 = inlined_call_operand.vmem [shape: f32[256,11], index: 7, kind: output, shape index: {}]
  %s8 = sld [smem:[#allocation0]]
  $region38: #{tpu_custom_call.1} parent=0
    _
  %s10 = ssub.s32 1, %s8
  %s11 = scalar_select 0, %s10, %s8
  // Predicated region
  $region2: #{tpu_custom_call.1} parent=0 // pred_check
    _
  $region3: #{tpu_custom_call.1} parent=0 // pred_check_branch
    %13 = sbr.rel (0) target = $region5
  $region4: #{tpu_custom_call.1} parent=0 // pred_region
    _
  $region5: #{tpu_custom_call.1} parent=0 // pred_fallthru
    _
  // Predicated region
  $region6: #{tpu_custom_call.1} parent=0 // pred_check
    _
  $region7: #{tpu_custom_call.1} parent=0 // pred_check_branch
    %15 = sbr.rel (0) target = $region9
  $region8: #{tpu_custom_call.1} parent=0 // pred_region
    _
  $region9: #{tpu_custom_call.1} parent=0 // pred_fallthru
    _
  // Predicated region
  $region10: #{tpu_custom_call.1} parent=0 // pred_check
    _
  $region11: #{tpu_custom_call.1} parent=0 // pred_check_branch
    %17 = sbr.rel (0) target = $region13
  $region12: #{tpu_custom_call.1} parent=0 // pred_region
    _
  $region13: #{tpu_custom_call.1} parent=0 // pred_fallthru
    _
  // Predicated region
  $region14: #{tpu_custom_call.1} parent=0 // pred_check
    _
  $region15: #{tpu_custom_call.1} parent=0 // pred_check_branch
    %19 = sbr.rel (0) target = $region17
  $region16: #{tpu_custom_call.1} parent=0 // pred_region
    _
  $region17: #{tpu_custom_call.1} parent=0 // pred_fallthru
    _
  // Predicated region
  $region18: #{tpu_custom_call.1} parent=0 // pred_check
    _
  $region19: #{tpu_custom_call.1} parent=0 // pred_check_branch
    %21 = sbr.rel (0) target = $region21
  $region20: #{tpu_custom_call.1} parent=0 // pred_region
    _
  $region21: #{tpu_custom_call.1} parent=0 // pred_fallthru
    _
  // Predicated region
  $region22: #{tpu_custom_call.1} parent=0 // pred_check
    _
  $region23: #{tpu_custom_call.1} parent=0 // pred_check_branch
    %23 = sbr.rel (0) target = $region25
  $region24: #{tpu_custom_call.1} parent=0 // pred_region
    _
  $region25: #{tpu_custom_call.1} parent=0 // pred_fallthru
    _
  // Predicated region
  $region26: #{tpu_custom_call.1} parent=0 // pred_check
    _
  $region27: #{tpu_custom_call.1} parent=0 // pred_check_branch
    %25 = sbr.rel (0) target = $region29
  $region28: #{tpu_custom_call.1} parent=0 // pred_region
    _
  $region29: #{tpu_custom_call.1} parent=0 // pred_fallthru
    _
  %v26 = vld [vmem:[%s1] sm:$0x7]
  %v27 = vld [vmem:[%s2] sm:$0x1]
  %v28 = vld [vmem:[%s3] sm:$0xf]
  %v29 = vld [vmem:[%s3 + $0x4] sm:$0xf]
  %v30 = vld [vmem:[%s3 + $0x8] sm:$0xf]
  %v31 = vld [vmem:[%s3 + $0xc] sm:$0xf]
  %v32 = vld [vmem:[%s3 + $0x10] sm:$0xf]
  %v33 = vld [vmem:[%s3 + $0x14] sm:$0xf]
  %v34 = vld [vmem:[%s3 + $0x18] sm:$0xf]
  %v35 = vld [vmem:[%s3 + $0x1c] sm:$0xf]
  %v36 = vld [vmem:[%s3 + $0x20] sm:$0xf]
  %v37 = vld [vmem:[%s3 + $0x24] sm:$0xf]
  %v38 = vld [vmem:[%s3 + $0x28] sm:$0xf]
  %v39 = vld [vmem:[%s3 + $0x2c] sm:$0xf]
  %v40 = vld [vmem:[%s3 + $0x30] sm:$0xf]
  %v41 = vld [vmem:[%s3 + $0x34] sm:$0xf]
  %v42 = vld [vmem:[%s3 + $0x38] sm:$0xf]
  %v43 = vld [vmem:[%s3 + $0x3c] sm:$0xf]
  %v44 = vld [vmem:[%s4] sm:$0x1]
  %v45 = vld [vmem:[%s5] sm:$0xf]
  %v46 = vld [vmem:[%s5 + $0x4] sm:$0xf]
  %v47 = vld [vmem:[%s5 + $0x8] sm:$0xf]
  %v48 = vld [vmem:[%s5 + $0xc] sm:$0xf]
  %v49 = vld [vmem:[%s5 + $0x10] sm:$0xf]
  %v50 = vld [vmem:[%s5 + $0x14] sm:$0xf]
  %v51 = vld [vmem:[%s5 + $0x18] sm:$0xf]
  %v52 = vld [vmem:[%s5 + $0x1c] sm:$0xf]
  %v53 = vld [vmem:[%s5 + $0x20] sm:$0xf]
  %v54 = vld [vmem:[%s5 + $0x24] sm:$0xf]
  %v55 = vld [vmem:[%s5 + $0x28] sm:$0xf]
  %v56 = vld [vmem:[%s5 + $0x2c] sm:$0xf]
  %v57 = vld [vmem:[%s5 + $0x30] sm:$0xf]
  %v58 = vld [vmem:[%s5 + $0x34] sm:$0xf]
  %v59 = vld [vmem:[%s5 + $0x38] sm:$0xf]
  %v60 = vld [vmem:[%s5 + $0x3c] sm:$0xf]
  %v61 = vld [vmem:[%s6] sm:$0x1]
  %v62 = vld [vmem:[%s0] sm:$0xff]
  %v63 = vld [vmem:[%s0 + $0x8] sm:$0xff]
  %v64 = vld [vmem:[%s0 + $0x10] sm:$0xff]
  %v65 = vld [vmem:[%s0 + $0x18] sm:$0xff]
  %v66 = vld [vmem:[%s0 + $0x20] sm:$0xff]
  %v67 = vld [vmem:[%s0 + $0x28] sm:$0xff]
  %v68 = vld [vmem:[%s0 + $0x30] sm:$0xff]
  %v69 = vld [vmem:[%s0 + $0x38] sm:$0xff]
  %v70 = vld [vmem:[%s0 + $0x40] sm:$0xff]
  %v71 = vld [vmem:[%s0 + $0x48] sm:$0xff]
  %v72 = vld [vmem:[%s0 + $0x50] sm:$0xff]
  %v73 = vld [vmem:[%s0 + $0x58] sm:$0xff]
  %v74 = vld [vmem:[%s0 + $0x60] sm:$0xff]
  %v75 = vld [vmem:[%s0 + $0x68] sm:$0xff]
  %v76 = vld [vmem:[%s0 + $0x70] sm:$0xff]
  %v77 = vld [vmem:[%s0 + $0x78] sm:$0xff]
  %v78 = vld [vmem:[%s0 + $0x80] sm:$0xff]
  %v79 = vld [vmem:[%s0 + $0x88] sm:$0xff]
  %v80 = vld [vmem:[%s0 + $0x90] sm:$0xff]
  %v81 = vld [vmem:[%s0 + $0x98] sm:$0xff]
  %v82 = vld [vmem:[%s0 + $0xa0] sm:$0xff]
  %v83 = vld [vmem:[%s0 + $0xa8] sm:$0xff]
  %v84 = vld [vmem:[%s0 + $0xb0] sm:$0xff]
  %v85 = vld [vmem:[%s0 + $0xb8] sm:$0xff]
  %v86 = vld [vmem:[%s0 + $0xc0] sm:$0xff]
  %v87 = vld [vmem:[%s0 + $0xc8] sm:$0xff]
  %v88 = vld [vmem:[%s0 + $0xd0] sm:$0xff]
  %v89 = vld [vmem:[%s0 + $0xd8] sm:$0xff]
  %v90 = vld [vmem:[%s0 + $0xe0] sm:$0xff]
  %v91 = vld [vmem:[%s0 + $0xe8] sm:$0xff]
  %v92 = vld [vmem:[%s0 + $0xf0] sm:$0xff]
  %v93 = vld [vmem:[%s0 + $0xf8] sm:$0xff]
  %95 = vset.pattern.permute.xlu0 0
  %96 = vperm.xlu0 %95, %v62
  %v97 = vpop.permute.xlu0 %96
  %100 = vset.pattern.permute.xlu0 0
  %101 = vperm.xlu0 %100, %v63
  %v102 = vpop.permute.xlu0 %101
  %105 = vset.pattern.permute.xlu0 0
  %106 = vperm.xlu0 %105, %v64
  %v107 = vpop.permute.xlu0 %106
  %110 = vset.pattern.permute.xlu0 0
  %111 = vperm.xlu0 %110, %v65
  %v112 = vpop.permute.xlu0 %111
  %115 = vset.pattern.permute.xlu0 0
  %116 = vperm.xlu0 %115, %v66
  %v117 = vpop.permute.xlu0 %116
  %120 = vset.pattern.permute.xlu0 0
  %121 = vperm.xlu0 %120, %v67
  %v122 = vpop.permute.xlu0 %121
  %125 = vset.pattern.permute.xlu0 0
  %126 = vperm.xlu0 %125, %v68
  %v127 = vpop.permute.xlu0 %126
  %130 = vset.pattern.permute.xlu0 0
  %131 = vperm.xlu0 %130, %v69
  %v132 = vpop.permute.xlu0 %131
  %135 = vset.pattern.permute.xlu0 0
  %136 = vperm.xlu0 %135, %v70
  %v137 = vpop.permute.xlu0 %136
  %140 = vset.pattern.permute.xlu0 0
  %141 = vperm.xlu0 %140, %v71
  %v142 = vpop.permute.xlu0 %141
  %145 = vset.pattern.permute.xlu0 0
  %146 = vperm.xlu0 %145, %v72
  %v147 = vpop.permute.xlu0 %146
  %150 = vset.pattern.permute.xlu0 0
  %151 = vperm.xlu0 %150, %v73
  %v152 = vpop.permute.xlu0 %151
  %155 = vset.pattern.permute.xlu0 0
  %156 = vperm.xlu0 %155, %v74
  %v157 = vpop.permute.xlu0 %156
  %160 = vset.pattern.permute.xlu0 0
  %161 = vperm.xlu0 %160, %v75
  %v162 = vpop.permute.xlu0 %161
  %165 = vset.pattern.permute.xlu0 0
  %166 = vperm.xlu0 %165, %v76
  %v167 = vpop.permute.xlu0 %166
  %170 = vset.pattern.permute.xlu0 0
  %171 = vperm.xlu0 %170, %v77
  %v172 = vpop.permute.xlu0 %171
  %175 = vset.pattern.permute.xlu0 0
  %176 = vperm.xlu0 %175, %v78
  %v177 = vpop.permute.xlu0 %176
  %180 = vset.pattern.permute.xlu0 0
  %181 = vperm.xlu0 %180, %v79
  %v182 = vpop.permute.xlu0 %181
  %185 = vset.pattern.permute.xlu0 0
  %186 = vperm.xlu0 %185, %v80
  %v187 = vpop.permute.xlu0 %186
  %190 = vset.pattern.permute.xlu0 0
  %191 = vperm.xlu0 %190, %v81
  %v192 = vpop.permute.xlu0 %191
  %195 = vset.pattern.permute.xlu0 0
  %196 = vperm.xlu0 %195, %v82
  %v197 = vpop.permute.xlu0 %196
  %200 = vset.pattern.permute.xlu0 0
  %201 = vperm.xlu0 %200, %v83
  %v202 = vpop.permute.xlu0 %201
  %205 = vset.pattern.permute.xlu0 0
  %206 = vperm.xlu0 %205, %v84
  %v207 = vpop.permute.xlu0 %206
  %210 = vset.pattern.permute.xlu0 0
  %211 = vperm.xlu0 %210, %v85
  %v212 = vpop.permute.xlu0 %211
  %215 = vset.pattern.permute.xlu0 0
  %216 = vperm.xlu0 %215, %v86
  %v217 = vpop.permute.xlu0 %216
  %220 = vset.pattern.permute.xlu0 0
  %221 = vperm.xlu0 %220, %v87
  %v222 = vpop.permute.xlu0 %221
  %225 = vset.pattern.permute.xlu0 0
  %226 = vperm.xlu0 %225, %v88
  %v227 = vpop.permute.xlu0 %226
  %230 = vset.pattern.permute.xlu0 0
  %231 = vperm.xlu0 %230, %v89
  %v232 = vpop.permute.xlu0 %231
  %235 = vset.pattern.permute.xlu0 0
  %236 = vperm.xlu0 %235, %v90
  %v237 = vpop.permute.xlu0 %236
  %240 = vset.pattern.permute.xlu0 0
  %241 = vperm.xlu0 %240, %v91
  %v242 = vpop.permute.xlu0 %241
  %245 = vset.pattern.permute.xlu0 0
  %246 = vperm.xlu0 %245, %v92
  %v247 = vpop.permute.xlu0 %246
  %250 = vset.pattern.permute.xlu0 0
  %251 = vperm.xlu0 %250, %v93
  %v252 = vpop.permute.xlu0 %251
  %v254 = vperm.slane %v26, 0
  %v255 = vmul.f32 %v97, %v254
  %v256 = vmul.f32 %v102, %v254
  %v257 = vmul.f32 %v107, %v254
  %v258 = vmul.f32 %v112, %v254
  %v259 = vmul.f32 %v117, %v254
  %v260 = vmul.f32 %v122, %v254
  %v261 = vmul.f32 %v127, %v254
  %v262 = vmul.f32 %v132, %v254
  %v263 = vmul.f32 %v137, %v254
  %v264 = vmul.f32 %v142, %v254
  %v265 = vmul.f32 %v147, %v254
  %v266 = vmul.f32 %v152, %v254
  %v267 = vmul.f32 %v157, %v254
  %v268 = vmul.f32 %v162, %v254
  %v269 = vmul.f32 %v167, %v254
  %v270 = vmul.f32 %v172, %v254
  %v271 = vmul.f32 %v177, %v254
  %v272 = vmul.f32 %v182, %v254
  %v273 = vmul.f32 %v187, %v254
  %v274 = vmul.f32 %v192, %v254
  %v275 = vmul.f32 %v197, %v254
  %v276 = vmul.f32 %v202, %v254
  %v277 = vmul.f32 %v207, %v254
  %v278 = vmul.f32 %v212, %v254
  %v279 = vmul.f32 %v217, %v254
  %v280 = vmul.f32 %v222, %v254
  %v281 = vmul.f32 %v227, %v254
  %v282 = vmul.f32 %v232, %v254
  %v283 = vmul.f32 %v237, %v254
  %v284 = vmul.f32 %v242, %v254
  %v285 = vmul.f32 %v247, %v254
  %v286 = vmul.f32 %v252, %v254
  %287 = vset.pattern.permute.xlu0 1
  %288 = vperm.xlu0 %287, %v62
  %v289 = vpop.permute.xlu0 %288
  %291 = vset.pattern.permute.xlu0 1
  %292 = vperm.xlu0 %291, %v63
  %v293 = vpop.permute.xlu0 %292
  %295 = vset.pattern.permute.xlu0 1
  %296 = vperm.xlu0 %295, %v64
  %v297 = vpop.permute.xlu0 %296
  %299 = vset.pattern.permute.xlu0 1
  %300 = vperm.xlu0 %299, %v65
  %v301 = vpop.permute.xlu0 %300
  %303 = vset.pattern.permute.xlu0 1
  %304 = vperm.xlu0 %303, %v66
  %v305 = vpop.permute.xlu0 %304
  %307 = vset.pattern.permute.xlu0 1
  %308 = vperm.xlu0 %307, %v67
  %v309 = vpop.permute.xlu0 %308
  %311 = vset.pattern.permute.xlu0 1
  %312 = vperm.xlu0 %311, %v68
  %v313 = vpop.permute.xlu0 %312
  %315 = vset.pattern.permute.xlu0 1
  %316 = vperm.xlu0 %315, %v69
  %v317 = vpop.permute.xlu0 %316
  %319 = vset.pattern.permute.xlu0 1
  %320 = vperm.xlu0 %319, %v70
  %v321 = vpop.permute.xlu0 %320
  %323 = vset.pattern.permute.xlu0 1
  %324 = vperm.xlu0 %323, %v71
  %v325 = vpop.permute.xlu0 %324
  %327 = vset.pattern.permute.xlu0 1
  %328 = vperm.xlu0 %327, %v72
  %v329 = vpop.permute.xlu0 %328
  %331 = vset.pattern.permute.xlu0 1
  %332 = vperm.xlu0 %331, %v73
  %v333 = vpop.permute.xlu0 %332
  %335 = vset.pattern.permute.xlu0 1
  %336 = vperm.xlu0 %335, %v74
  %v337 = vpop.permute.xlu0 %336
  %339 = vset.pattern.permute.xlu0 1
  %340 = vperm.xlu0 %339, %v75
  %v341 = vpop.permute.xlu0 %340
  %343 = vset.pattern.permute.xlu0 1
  %344 = vperm.xlu0 %343, %v76
  %v345 = vpop.permute.xlu0 %344
  %347 = vset.pattern.permute.xlu0 1
  %348 = vperm.xlu0 %347, %v77
  %v349 = vpop.permute.xlu0 %348
  %351 = vset.pattern.permute.xlu0 1
  %352 = vperm.xlu0 %351, %v78
  %v353 = vpop.permute.xlu0 %352
  %355 = vset.pattern.permute.xlu0 1
  %356 = vperm.xlu0 %355, %v79
  %v357 = vpop.permute.xlu0 %356
  %359 = vset.pattern.permute.xlu0 1
  %360 = vperm.xlu0 %359, %v80
  %v361 = vpop.permute.xlu0 %360
  %363 = vset.pattern.permute.xlu0 1
  %364 = vperm.xlu0 %363, %v81
  %v365 = vpop.permute.xlu0 %364
  %367 = vset.pattern.permute.xlu0 1
  %368 = vperm.xlu0 %367, %v82
  %v369 = vpop.permute.xlu0 %368
  %371 = vset.pattern.permute.xlu0 1
  %372 = vperm.xlu0 %371, %v83
  %v373 = vpop.permute.xlu0 %372
  %375 = vset.pattern.permute.xlu0 1
  %376 = vperm.xlu0 %375, %v84
  %v377 = vpop.permute.xlu0 %376
  %379 = vset.pattern.permute.xlu0 1
  %380 = vperm.xlu0 %379, %v85
  %v381 = vpop.permute.xlu0 %380
  %383 = vset.pattern.permute.xlu0 1
  %384 = vperm.xlu0 %383, %v86
  %v385 = vpop.permute.xlu0 %384
  %387 = vset.pattern.permute.xlu0 1
  %388 = vperm.xlu0 %387, %v87
  %v389 = vpop.permute.xlu0 %388
  %391 = vset.pattern.permute.xlu0 1
  %392 = vperm.xlu0 %391, %v88
  %v393 = vpop.permute.xlu0 %392
  %395 = vset.pattern.permute.xlu0 1
  %396 = vperm.xlu0 %395, %v89
  %v397 = vpop.permute.xlu0 %396
  %399 = vset.pattern.permute.xlu0 1
  %400 = vperm.xlu0 %399, %v90
  %v401 = vpop.permute.xlu0 %400
  %403 = vset.pattern.permute.xlu0 1
  %404 = vperm.xlu0 %403, %v91
  %v405 = vpop.permute.xlu0 %404
  %407 = vset.pattern.permute.xlu0 1
  %408 = vperm.xlu0 %407, %v92
  %v409 = vpop.permute.xlu0 %408
  %411 = vset.pattern.permute.xlu0 1
  %412 = vperm.xlu0 %411, %v93
  %v413 = vpop.permute.xlu0 %412
  %v415 = vperm.slane %v26, 1
  %v416 = vmul.f32 %v289, %v415
  %v417 = vmul.f32 %v293, %v415
  %v418 = vmul.f32 %v297, %v415
  %v419 = vmul.f32 %v301, %v415
  %v420 = vmul.f32 %v305, %v415
  %v421 = vmul.f32 %v309, %v415
  %v422 = vmul.f32 %v313, %v415
  %v423 = vmul.f32 %v317, %v415
  %v424 = vmul.f32 %v321, %v415
  %v425 = vmul.f32 %v325, %v415
  %v426 = vmul.f32 %v329, %v415
  %v427 = vmul.f32 %v333, %v415
  %v428 = vmul.f32 %v337, %v415
  %v429 = vmul.f32 %v341, %v415
  %v430 = vmul.f32 %v345, %v415
  %v431 = vmul.f32 %v349, %v415
  %v432 = vmul.f32 %v353, %v415
  %v433 = vmul.f32 %v357, %v415
  %v434 = vmul.f32 %v361, %v415
  %v435 = vmul.f32 %v365, %v415
  %v436 = vmul.f32 %v369, %v415
  %v437 = vmul.f32 %v373, %v415
  %v438 = vmul.f32 %v377, %v415
  %v439 = vmul.f32 %v381, %v415
  %v440 = vmul.f32 %v385, %v415
  %v441 = vmul.f32 %v389, %v415
  %v442 = vmul.f32 %v393, %v415
  %v443 = vmul.f32 %v397, %v415
  %v444 = vmul.f32 %v401, %v415
  %v445 = vmul.f32 %v405, %v415
  %v446 = vmul.f32 %v409, %v415
  %v447 = vmul.f32 %v413, %v415
  %v448 = vadd.f32 %v255, %v416
  %v449 = vadd.f32 %v256, %v417
  %v450 = vadd.f32 %v257, %v418
  %v451 = vadd.f32 %v258, %v419
  %v452 = vadd.f32 %v259, %v420
  %v453 = vadd.f32 %v260, %v421
  %v454 = vadd.f32 %v261, %v422
  %v455 = vadd.f32 %v262, %v423
  %v456 = vadd.f32 %v263, %v424
  %v457 = vadd.f32 %v264, %v425
  %v458 = vadd.f32 %v265, %v426
  %v459 = vadd.f32 %v266, %v427
  %v460 = vadd.f32 %v267, %v428
  %v461 = vadd.f32 %v268, %v429
  %v462 = vadd.f32 %v269, %v430
  %v463 = vadd.f32 %v270, %v431
  %v464 = vadd.f32 %v271, %v432
  %v465 = vadd.f32 %v272, %v433
  %v466 = vadd.f32 %v273, %v434
  %v467 = vadd.f32 %v274, %v435
  %v468 = vadd.f32 %v275, %v436
  %v469 = vadd.f32 %v276, %v437
  %v470 = vadd.f32 %v277, %v438
  %v471 = vadd.f32 %v278, %v439
  %v472 = vadd.f32 %v279, %v440
  %v473 = vadd.f32 %v280, %v441
  %v474 = vadd.f32 %v281, %v442
  %v475 = vadd.f32 %v282, %v443
  %v476 = vadd.f32 %v283, %v444
  %v477 = vadd.f32 %v284, %v445
  %v478 = vadd.f32 %v285, %v446
  %v479 = vadd.f32 %v286, %v447
  %480 = vset.pattern.permute.xlu0 2
  %481 = vperm.xlu0 %480, %v62
  %v482 = vpop.permute.xlu0 %481
  %484 = vset.pattern.permute.xlu0 2
  %485 = vperm.xlu0 %484, %v63
  %v486 = vpop.permute.xlu0 %485
  %488 = vset.pattern.permute.xlu0 2
  %489 = vperm.xlu0 %488, %v64
  %v490 = vpop.permute.xlu0 %489
  %492 = vset.pattern.permute.xlu0 2
  %493 = vperm.xlu0 %492, %v65
  %v494 = vpop.permute.xlu0 %493
  %496 = vset.pattern.permute.xlu0 2
  %497 = vperm.xlu0 %496, %v66
  %v498 = vpop.permute.xlu0 %497
  %500 = vset.pattern.permute.xlu0 2
  %501 = vperm.xlu0 %500, %v67
  %v502 = vpop.permute.xlu0 %501
  %504 = vset.pattern.permute.xlu0 2
  %505 = vperm.xlu0 %504, %v68
  %v506 = vpop.permute.xlu0 %505
  %508 = vset.pattern.permute.xlu0 2
  %509 = vperm.xlu0 %508, %v69
  %v510 = vpop.permute.xlu0 %509
  %512 = vset.pattern.permute.xlu0 2
  %513 = vperm.xlu0 %512, %v70
  %v514 = vpop.permute.xlu0 %513
  %516 = vset.pattern.permute.xlu0 2
  %517 = vperm.xlu0 %516, %v71
  %v518 = vpop.permute.xlu0 %517
  %520 = vset.pattern.permute.xlu0 2
  %521 = vperm.xlu0 %520, %v72
  %v522 = vpop.permute.xlu0 %521
  %524 = vset.pattern.permute.xlu0 2
  %525 = vperm.xlu0 %524, %v73
  %v526 = vpop.permute.xlu0 %525
  %528 = vset.pattern.permute.xlu0 2
  %529 = vperm.xlu0 %528, %v74
  %v530 = vpop.permute.xlu0 %529
  %532 = vset.pattern.permute.xlu0 2
  %533 = vperm.xlu0 %532, %v75
  %v534 = vpop.permute.xlu0 %533
  %536 = vset.pattern.permute.xlu0 2
  %537 = vperm.xlu0 %536, %v76
  %v538 = vpop.permute.xlu0 %537
  %540 = vset.pattern.permute.xlu0 2
  %541 = vperm.xlu0 %540, %v77
  %v542 = vpop.permute.xlu0 %541
  %544 = vset.pattern.permute.xlu0 2
  %545 = vperm.xlu0 %544, %v78
  %v546 = vpop.permute.xlu0 %545
  %548 = vset.pattern.permute.xlu0 2
  %549 = vperm.xlu0 %548, %v79
  %v550 = vpop.permute.xlu0 %549
  %552 = vset.pattern.permute.xlu0 2
  %553 = vperm.xlu0 %552, %v80
  %v554 = vpop.permute.xlu0 %553
  %556 = vset.pattern.permute.xlu0 2
  %557 = vperm.xlu0 %556, %v81
  %v558 = vpop.permute.xlu0 %557
  %560 = vset.pattern.permute.xlu0 2
  %561 = vperm.xlu0 %560, %v82
  %v562 = vpop.permute.xlu0 %561
  %564 = vset.pattern.permute.xlu0 2
  %565 = vperm.xlu0 %564, %v83
  %v566 = vpop.permute.xlu0 %565
  %568 = vset.pattern.permute.xlu0 2
  %569 = vperm.xlu0 %568, %v84
  %v570 = vpop.permute.xlu0 %569
  %572 = vset.pattern.permute.xlu0 2
  %573 = vperm.xlu0 %572, %v85
  %v574 = vpop.permute.xlu0 %573
  %576 = vset.pattern.permute.xlu0 2
  %577 = vperm.xlu0 %576, %v86
  %v578 = vpop.permute.xlu0 %577
  %580 = vset.pattern.permute.xlu0 2
  %581 = vperm.xlu0 %580, %v87
  %v582 = vpop.permute.xlu0 %581
  %584 = vset.pattern.permute.xlu0 2
  %585 = vperm.xlu0 %584, %v88
  %v586 = vpop.permute.xlu0 %585
  %588 = vset.pattern.permute.xlu0 2
  %589 = vperm.xlu0 %588, %v89
  %v590 = vpop.permute.xlu0 %589
  %592 = vset.pattern.permute.xlu0 2
  %593 = vperm.xlu0 %592, %v90
  %v594 = vpop.permute.xlu0 %593
  %596 = vset.pattern.permute.xlu0 2
  %597 = vperm.xlu0 %596, %v91
  %v598 = vpop.permute.xlu0 %597
  %600 = vset.pattern.permute.xlu0 2
  %601 = vperm.xlu0 %600, %v92
  %v602 = vpop.permute.xlu0 %601
  %604 = vset.pattern.permute.xlu0 2
  %605 = vperm.xlu0 %604, %v93
  %v606 = vpop.permute.xlu0 %605
  %v608 = vperm.slane %v26, 2
  %v609 = vmul.f32 %v482, %v608
  %v610 = vmul.f32 %v486, %v608
  %v611 = vmul.f32 %v490, %v608
  %v612 = vmul.f32 %v494, %v608
  %v613 = vmul.f32 %v498, %v608
  %v614 = vmul.f32 %v502, %v608
  %v615 = vmul.f32 %v506, %v608
  %v616 = vmul.f32 %v510, %v608
  %v617 = vmul.f32 %v514, %v608
  %v618 = vmul.f32 %v518, %v608
  %v619 = vmul.f32 %v522, %v608
  %v620 = vmul.f32 %v526, %v608
  %v621 = vmul.f32 %v530, %v608
  %v622 = vmul.f32 %v534, %v608
  %v623 = vmul.f32 %v538, %v608
  %v624 = vmul.f32 %v542, %v608
  %v625 = vmul.f32 %v546, %v608
  %v626 = vmul.f32 %v550, %v608
  %v627 = vmul.f32 %v554, %v608
  %v628 = vmul.f32 %v558, %v608
  %v629 = vmul.f32 %v562, %v608
  %v630 = vmul.f32 %v566, %v608
  %v631 = vmul.f32 %v570, %v608
  %v632 = vmul.f32 %v574, %v608
  %v633 = vmul.f32 %v578, %v608
  %v634 = vmul.f32 %v582, %v608
  %v635 = vmul.f32 %v586, %v608
  %v636 = vmul.f32 %v590, %v608
  %v637 = vmul.f32 %v594, %v608
  %v638 = vmul.f32 %v598, %v608
  %v639 = vmul.f32 %v602, %v608
  %v640 = vmul.f32 %v606, %v608
  %v641 = vadd.f32 %v448, %v609
  %v642 = vadd.f32 %v449, %v610
  %v643 = vadd.f32 %v450, %v611
  %v644 = vadd.f32 %v451, %v612
  %v645 = vadd.f32 %v452, %v613
  %v646 = vadd.f32 %v453, %v614
  %v647 = vadd.f32 %v454, %v615
  %v648 = vadd.f32 %v455, %v616
  %v649 = vadd.f32 %v456, %v617
  %v650 = vadd.f32 %v457, %v618
  %v651 = vadd.f32 %v458, %v619
  %v652 = vadd.f32 %v459, %v620
  %v653 = vadd.f32 %v460, %v621
  %v654 = vadd.f32 %v461, %v622
  %v655 = vadd.f32 %v462, %v623
  %v656 = vadd.f32 %v463, %v624
  %v657 = vadd.f32 %v464, %v625
  %v658 = vadd.f32 %v465, %v626
  %v659 = vadd.f32 %v466, %v627
  %v660 = vadd.f32 %v467, %v628
  %v661 = vadd.f32 %v468, %v629
  %v662 = vadd.f32 %v469, %v630
  %v663 = vadd.f32 %v470, %v631
  %v664 = vadd.f32 %v471, %v632
  %v665 = vadd.f32 %v472, %v633
  %v666 = vadd.f32 %v473, %v634
  %v667 = vadd.f32 %v474, %v635
  %v668 = vadd.f32 %v475, %v636
  %v669 = vadd.f32 %v476, %v637
  %v670 = vadd.f32 %v477, %v638
  %v671 = vadd.f32 %v478, %v639
  %v672 = vadd.f32 %v479, %v640
  %v674 = vperm.slane %v27, 0
  %v676 = vadd.f32 %v641, %v674
  %v677 = vadd.f32 %v642, %v674
  %v678 = vadd.f32 %v643, %v674
  %v679 = vadd.f32 %v644, %v674
  %v680 = vadd.f32 %v645, %v674
  %v681 = vadd.f32 %v646, %v674
  %v682 = vadd.f32 %v647, %v674
  %v683 = vadd.f32 %v648, %v674
  %v684 = vadd.f32 %v649, %v674
  %v685 = vadd.f32 %v650, %v674
  %v686 = vadd.f32 %v651, %v674
  %v687 = vadd.f32 %v652, %v674
  %v688 = vadd.f32 %v653, %v674
  %v689 = vadd.f32 %v654, %v674
  %v690 = vadd.f32 %v655, %v674
  %v691 = vadd.f32 %v656, %v674
  %v692 = vadd.f32 %v657, %v674
  %v693 = vadd.f32 %v658, %v674
  %v694 = vadd.f32 %v659, %v674
  %v695 = vadd.f32 %v660, %v674
  %v696 = vadd.f32 %v661, %v674
  %v697 = vadd.f32 %v662, %v674
  %v698 = vadd.f32 %v663, %v674
  %v699 = vadd.f32 %v664, %v674
  %v700 = vadd.f32 %v665, %v674
  %v701 = vadd.f32 %v666, %v674
  %v702 = vadd.f32 %v667, %v674
  %v703 = vadd.f32 %v668, %v674
  %v704 = vadd.f32 %v669, %v674
  %v705 = vadd.f32 %v670, %v674
  %v706 = vadd.f32 %v671, %v674
  %v707 = vadd.f32 %v672, %v674
  %v708 = vmax.f32 %v676, 0.0
  %v709 = vmax.f32 %v677, 0.0
  %v710 = vmax.f32 %v678, 0.0
  %v711 = vmax.f32 %v679, 0.0
  %v712 = vmax.f32 %v680, 0.0
  %v713 = vmax.f32 %v681, 0.0
  %v714 = vmax.f32 %v682, 0.0
  %v715 = vmax.f32 %v683, 0.0
  %v716 = vmax.f32 %v684, 0.0
  %v717 = vmax.f32 %v685, 0.0
  %v718 = vmax.f32 %v686, 0.0
  %v719 = vmax.f32 %v687, 0.0
  %v720 = vmax.f32 %v688, 0.0
  %v721 = vmax.f32 %v689, 0.0
  %v722 = vmax.f32 %v690, 0.0
  %v723 = vmax.f32 %v691, 0.0
  %v724 = vmax.f32 %v692, 0.0
  %v725 = vmax.f32 %v693, 0.0
  %v726 = vmax.f32 %v694, 0.0
  %v727 = vmax.f32 %v695, 0.0
  %v728 = vmax.f32 %v696, 0.0
  %v729 = vmax.f32 %v697, 0.0
  %v730 = vmax.f32 %v698, 0.0
  %v731 = vmax.f32 %v699, 0.0
  %v732 = vmax.f32 %v700, 0.0
  %v733 = vmax.f32 %v701, 0.0
  %v734 = vmax.f32 %v702, 0.0
  %v735 = vmax.f32 %v703, 0.0
  %v736 = vmax.f32 %v704, 0.0
  %v737 = vmax.f32 %v705, 0.0
  %v738 = vmax.f32 %v706, 0.0
  %v739 = vmax.f32 %v707, 0.0
  %v740 = vpack.c.bf16 %v709, %v708
  %v741 = vpack.c.bf16 %v711, %v710
  %v742 = vpack.c.bf16 %v713, %v712
  %v743 = vpack.c.bf16 %v715, %v714
  %v744 = vpack.c.bf16 %v717, %v716
  %v745 = vpack.c.bf16 %v719, %v718
  %v746 = vpack.c.bf16 %v721, %v720
  %v747 = vpack.c.bf16 %v723, %v722
  %v748 = vpack.c.bf16 %v725, %v724
  %v749 = vpack.c.bf16 %v727, %v726
  %v750 = vpack.c.bf16 %v729, %v728
  %v751 = vpack.c.bf16 %v731, %v730
  %v752 = vpack.c.bf16 %v733, %v732
  %v753 = vpack.c.bf16 %v735, %v734
  %v754 = vpack.c.bf16 %v737, %v736
  %v755 = vpack.c.bf16 %v739, %v738
  %v757 = vperm.slane %v44, 0
  %v775 = vunpack.c.l.b16 %v28
  %v776 = vunpack.c.l.b16 %v29
  %v777 = vunpack.c.l.b16 %v30
  %v778 = vunpack.c.l.b16 %v31
  %v779 = vunpack.c.l.b16 %v32
  %v780 = vunpack.c.l.b16 %v33
  %v781 = vunpack.c.l.b16 %v34
  %v782 = vunpack.c.l.b16 %v35
  %v783 = vunpack.c.l.b16 %v36
  %v784 = vunpack.c.l.b16 %v37
  %v785 = vunpack.c.l.b16 %v38
  %v786 = vunpack.c.l.b16 %v39
  %v787 = vunpack.c.l.b16 %v40
  %v788 = vunpack.c.l.b16 %v41
  %v789 = vunpack.c.l.b16 %v42
  %v790 = vunpack.c.l.b16 %v43
  %v791 = vpack.c.b16 %v776, %v775
  %v792 = vpack.c.b16 %v778, %v777
  %v793 = vpack.c.b16 %v780, %v779
  %v794 = vpack.c.b16 %v782, %v781
  %v795 = vpack.c.b16 %v784, %v783
  %v796 = vpack.c.b16 %v786, %v785
  %v797 = vpack.c.b16 %v788, %v787
  %v798 = vpack.c.b16 %v790, %v789
  %807 = vmatpush.bf16.msra.mxu0 %v798
  %808 = vmatpush.bf16.msra.mxu0 %v797
  %809 = vmatpush.bf16.msra.mxu0 %v796
  %810 = vmatpush.bf16.msra.mxu0 %v795
  %811 = vmatpush.bf16.msra.mxu0 %v794
  %812 = vmatpush.bf16.msra.mxu0 %v793
  %813 = vmatpush.bf16.msra.mxu0 %v792
  %814 = vmatpush.bf16.msra.mxu0 %v791
  %815 = vmatmul.bf16.gmra.mxu0 %v740
  %v816 = vpop.f32.mrf.mxu0
  %v817 = vadd.f32 %v757, %v816
  %v818 = vpop.f32.mrf.mxu0
  %v819 = vadd.f32 %v757, %v818
  %820 = vmatmul.bf16.gmra.mxu0 %v741
  %v821 = vpop.f32.mrf.mxu0
  %v822 = vadd.f32 %v757, %v821
  %v823 = vpop.f32.mrf.mxu0
  %v824 = vadd.f32 %v757, %v823
  %825 = vmatmul.bf16.gmra.mxu0 %v742
  %v826 = vpop.f32.mrf.mxu0
  %v827 = vadd.f32 %v757, %v826
  %v828 = vpop.f32.mrf.mxu0
  %v829 = vadd.f32 %v757, %v828
  %830 = vmatmul.bf16.gmra.mxu0 %v743
  %v831 = vpop.f32.mrf.mxu0
  %v832 = vadd.f32 %v757, %v831
  %v833 = vpop.f32.mrf.mxu0
  %v834 = vadd.f32 %v757, %v833
  %835 = vmatmul.bf16.gmra.mxu0 %v744
  %v836 = vpop.f32.mrf.mxu0
  %v837 = vadd.f32 %v757, %v836
  %v838 = vpop.f32.mrf.mxu0
  %v839 = vadd.f32 %v757, %v838
  %840 = vmatmul.bf16.gmra.mxu0 %v745
  %v841 = vpop.f32.mrf.mxu0
  %v842 = vadd.f32 %v757, %v841
  %v843 = vpop.f32.mrf.mxu0
  %v844 = vadd.f32 %v757, %v843
  %845 = vmatmul.bf16.gmra.mxu0 %v746
  %v846 = vpop.f32.mrf.mxu0
  %v847 = vadd.f32 %v757, %v846
  %v848 = vpop.f32.mrf.mxu0
  %v849 = vadd.f32 %v757, %v848
  %850 = vmatmul.bf16.gmra.mxu0 %v747
  %v851 = vpop.f32.mrf.mxu0
  %v852 = vadd.f32 %v757, %v851
  %v853 = vpop.f32.mrf.mxu0
  %v854 = vadd.f32 %v757, %v853
  %855 = vmatmul.bf16.gmra.mxu0 %v748
  %v856 = vpop.f32.mrf.mxu0
  %v857 = vadd.f32 %v757, %v856
  %v858 = vpop.f32.mrf.mxu0
  %v859 = vadd.f32 %v757, %v858
  %860 = vmatmul.bf16.gmra.mxu0 %v749
  %v861 = vpop.f32.mrf.mxu0
  %v862 = vadd.f32 %v757, %v861
  %v863 = vpop.f32.mrf.mxu0
  %v864 = vadd.f32 %v757, %v863
  %865 = vmatmul.bf16.gmra.mxu0 %v750
  %v866 = vpop.f32.mrf.mxu0
  %v867 = vadd.f32 %v757, %v866
  %v868 = vpop.f32.mrf.mxu0
  %v869 = vadd.f32 %v757, %v868
  %870 = vmatmul.bf16.gmra.mxu0 %v751
  %v871 = vpop.f32.mrf.mxu0
  %v872 = vadd.f32 %v757, %v871
  %v873 = vpop.f32.mrf.mxu0
  %v874 = vadd.f32 %v757, %v873
  %875 = vmatmul.bf16.gmra.mxu0 %v752
  %v876 = vpop.f32.mrf.mxu0
  %v877 = vadd.f32 %v757, %v876
  %v878 = vpop.f32.mrf.mxu0
  %v879 = vadd.f32 %v757, %v878
  %880 = vmatmul.bf16.gmra.mxu0 %v753
  %v881 = vpop.f32.mrf.mxu0
  %v882 = vadd.f32 %v757, %v881
  %v883 = vpop.f32.mrf.mxu0
  %v884 = vadd.f32 %v757, %v883
  %885 = vmatmul.bf16.gmra.mxu0 %v754
  %v886 = vpop.f32.mrf.mxu0
  %v887 = vadd.f32 %v757, %v886
  %v888 = vpop.f32.mrf.mxu0
  %v889 = vadd.f32 %v757, %v888
  %890 = vmatmul.bf16.gmra.mxu0 %v755
  %v891 = vpop.f32.mrf.mxu0
  %v892 = vadd.f32 %v757, %v891
  %v893 = vpop.f32.mrf.mxu0
  %v894 = vadd.f32 %v757, %v893
  %895 = vdwg.mxu0
  %v896 = vmax.f32 %v817, 0.0
  %v897 = vmax.f32 %v819, 0.0
  %v898 = vmax.f32 %v822, 0.0
  %v899 = vmax.f32 %v824, 0.0
  %v900 = vmax.f32 %v827, 0.0
  %v901 = vmax.f32 %v829, 0.0
  %v902 = vmax.f32 %v832, 0.0
  %v903 = vmax.f32 %v834, 0.0
  %v904 = vmax.f32 %v837, 0.0
  %v905 = vmax.f32 %v839, 0.0
  %v906 = vmax.f32 %v842, 0.0
  %v907 = vmax.f32 %v844, 0.0
  %v908 = vmax.f32 %v847, 0.0
  %v909 = vmax.f32 %v849, 0.0
  %v910 = vmax.f32 %v852, 0.0
  %v911 = vmax.f32 %v854, 0.0
  %v912 = vmax.f32 %v857, 0.0
  %v913 = vmax.f32 %v859, 0.0
  %v914 = vmax.f32 %v862, 0.0
  %v915 = vmax.f32 %v864, 0.0
  %v916 = vmax.f32 %v867, 0.0
  %v917 = vmax.f32 %v869, 0.0
  %v918 = vmax.f32 %v872, 0.0
  %v919 = vmax.f32 %v874, 0.0
  %v920 = vmax.f32 %v877, 0.0
  %v921 = vmax.f32 %v879, 0.0
  %v922 = vmax.f32 %v882, 0.0
  %v923 = vmax.f32 %v884, 0.0
  %v924 = vmax.f32 %v887, 0.0
  %v925 = vmax.f32 %v889, 0.0
  %v926 = vmax.f32 %v892, 0.0
  %v927 = vmax.f32 %v894, 0.0
  %v928 = vpack.c.bf16 %v897, %v896
  %v929 = vpack.c.bf16 %v899, %v898
  %v930 = vpack.c.bf16 %v901, %v900
  %v931 = vpack.c.bf16 %v903, %v902
  %v932 = vpack.c.bf16 %v905, %v904
  %v933 = vpack.c.bf16 %v907, %v906
  %v934 = vpack.c.bf16 %v909, %v908
  %v935 = vpack.c.bf16 %v911, %v910
  %v936 = vpack.c.bf16 %v913, %v912
  %v937 = vpack.c.bf16 %v915, %v914
  %v938 = vpack.c.bf16 %v917, %v916
  %v939 = vpack.c.bf16 %v919, %v918
  %v940 = vpack.c.bf16 %v921, %v920
  %v941 = vpack.c.bf16 %v923, %v922
  %v942 = vpack.c.bf16 %v925, %v924
  %v943 = vpack.c.bf16 %v927, %v926
  %v945 = vperm.slane %v61, 0
  %v963 = vunpack.c.l.b16 %v45
  %v964 = vunpack.c.l.b16 %v46
  %v965 = vunpack.c.l.b16 %v47
  %v966 = vunpack.c.l.b16 %v48
  %v967 = vunpack.c.l.b16 %v49
  %v968 = vunpack.c.l.b16 %v50
  %v969 = vunpack.c.l.b16 %v51
  %v970 = vunpack.c.l.b16 %v52
  %v971 = vunpack.c.l.b16 %v53
  %v972 = vunpack.c.l.b16 %v54
  %v973 = vunpack.c.l.b16 %v55
  %v974 = vunpack.c.l.b16 %v56
  %v975 = vunpack.c.l.b16 %v57
  %v976 = vunpack.c.l.b16 %v58
  %v977 = vunpack.c.l.b16 %v59
  %v978 = vunpack.c.l.b16 %v60
  %v979 = vpack.c.b16 %v964, %v963
  %v980 = vpack.c.b16 %v966, %v965
  %v981 = vpack.c.b16 %v968, %v967
  %v982 = vpack.c.b16 %v970, %v969
  %v983 = vpack.c.b16 %v972, %v971
  %v984 = vpack.c.b16 %v974, %v973
  %v985 = vpack.c.b16 %v976, %v975
  %v986 = vpack.c.b16 %v978, %v977
  %995 = vmatpush.bf16.msra.mxu0 %v986
  %996 = vmatpush.bf16.msra.mxu0 %v985
  %997 = vmatpush.bf16.msra.mxu0 %v984
  %998 = vmatpush.bf16.msra.mxu0 %v983
  %999 = vmatpush.bf16.msra.mxu0 %v982
  %1000 = vmatpush.bf16.msra.mxu0 %v981
  %1001 = vmatpush.bf16.msra.mxu0 %v980
  %1002 = vmatpush.bf16.msra.mxu0 %v979
  %1003 = vmatmul.bf16.gmra.mxu0 %v928
  %v1004 = vpop.f32.mrf.mxu0
  %v1005 = vadd.f32 %v945, %v1004
  %v1006 = vpop.f32.mrf.mxu0
  %v1007 = vadd.f32 %v945, %v1006
  %1008 = vmatmul.bf16.gmra.mxu0 %v929
  %v1009 = vpop.f32.mrf.mxu0
  %v1010 = vadd.f32 %v945, %v1009
  %v1011 = vpop.f32.mrf.mxu0
  %v1012 = vadd.f32 %v945, %v1011
  %1013 = vmatmul.bf16.gmra.mxu0 %v930
  %v1014 = vpop.f32.mrf.mxu0
  %v1015 = vadd.f32 %v945, %v1014
  %v1016 = vpop.f32.mrf.mxu0
  %v1017 = vadd.f32 %v945, %v1016
  %1018 = vmatmul.bf16.gmra.mxu0 %v931
  %v1019 = vpop.f32.mrf.mxu0
  %v1020 = vadd.f32 %v945, %v1019
  %v1021 = vpop.f32.mrf.mxu0
  %v1022 = vadd.f32 %v945, %v1021
  %1023 = vmatmul.bf16.gmra.mxu0 %v932
  %v1024 = vpop.f32.mrf.mxu0
  %v1025 = vadd.f32 %v945, %v1024
  %v1026 = vpop.f32.mrf.mxu0
  %v1027 = vadd.f32 %v945, %v1026
  %1028 = vmatmul.bf16.gmra.mxu0 %v933
  %v1029 = vpop.f32.mrf.mxu0
  %v1030 = vadd.f32 %v945, %v1029
  %v1031 = vpop.f32.mrf.mxu0
  %v1032 = vadd.f32 %v945, %v1031
  %1033 = vmatmul.bf16.gmra.mxu0 %v934
  %v1034 = vpop.f32.mrf.mxu0
  %v1035 = vadd.f32 %v945, %v1034
  %v1036 = vpop.f32.mrf.mxu0
  %v1037 = vadd.f32 %v945, %v1036
  %1038 = vmatmul.bf16.gmra.mxu0 %v935
  %v1039 = vpop.f32.mrf.mxu0
  %v1040 = vadd.f32 %v945, %v1039
  %v1041 = vpop.f32.mrf.mxu0
  %v1042 = vadd.f32 %v945, %v1041
  %1043 = vmatmul.bf16.gmra.mxu0 %v936
  %v1044 = vpop.f32.mrf.mxu0
  %v1045 = vadd.f32 %v945, %v1044
  %v1046 = vpop.f32.mrf.mxu0
  %v1047 = vadd.f32 %v945, %v1046
  %1048 = vmatmul.bf16.gmra.mxu0 %v937
  %v1049 = vpop.f32.mrf.mxu0
  %v1050 = vadd.f32 %v945, %v1049
  %v1051 = vpop.f32.mrf.mxu0
  %v1052 = vadd.f32 %v945, %v1051
  %1053 = vmatmul.bf16.gmra.mxu0 %v938
  %v1054 = vpop.f32.mrf.mxu0
  %v1055 = vadd.f32 %v945, %v1054
  %v1056 = vpop.f32.mrf.mxu0
  %v1057 = vadd.f32 %v945, %v1056
  %1058 = vmatmul.bf16.gmra.mxu0 %v939
  %v1059 = vpop.f32.mrf.mxu0
  %v1060 = vadd.f32 %v945, %v1059
  %v1061 = vpop.f32.mrf.mxu0
  %v1062 = vadd.f32 %v945, %v1061
  %1063 = vmatmul.bf16.gmra.mxu0 %v940
  %v1064 = vpop.f32.mrf.mxu0
  %v1065 = vadd.f32 %v945, %v1064
  %v1066 = vpop.f32.mrf.mxu0
  %v1067 = vadd.f32 %v945, %v1066
  %1068 = vmatmul.bf16.gmra.mxu0 %v941
  %v1069 = vpop.f32.mrf.mxu0
  %v1070 = vadd.f32 %v945, %v1069
  %v1071 = vpop.f32.mrf.mxu0
  %v1072 = vadd.f32 %v945, %v1071
  %1073 = vmatmul.bf16.gmra.mxu0 %v942
  %v1074 = vpop.f32.mrf.mxu0
  %v1075 = vadd.f32 %v945, %v1074
  %v1076 = vpop.f32.mrf.mxu0
  %v1077 = vadd.f32 %v945, %v1076
  %1078 = vmatmul.bf16.gmra.mxu0 %v943
  %v1079 = vpop.f32.mrf.mxu0
  %v1080 = vadd.f32 %v945, %v1079
  %v1081 = vpop.f32.mrf.mxu0
  %v1082 = vadd.f32 %v945, %v1081
  %1083 = vdwg.mxu0
  %vm1084 = vcmask 89088
  %1085 = vst.msk [vmem:[%s7] sm:$0xff] %vm1084, %v1005
  %1086 = vst.msk [vmem:[%s7 + $0x8] sm:$0xff] %vm1084, %v1007
  %1087 = vst.msk [vmem:[%s7 + $0x10] sm:$0xff] %vm1084, %v1010
  %1088 = vst.msk [vmem:[%s7 + $0x18] sm:$0xff] %vm1084, %v1012
  %1089 = vst.msk [vmem:[%s7 + $0x20] sm:$0xff] %vm1084, %v1015
  %1090 = vst.msk [vmem:[%s7 + $0x28] sm:$0xff] %vm1084, %v1017
  %1091 = vst.msk [vmem:[%s7 + $0x30] sm:$0xff] %vm1084, %v1020
  %1092 = vst.msk [vmem:[%s7 + $0x38] sm:$0xff] %vm1084, %v1022
  %1093 = vst.msk [vmem:[%s7 + $0x40] sm:$0xff] %vm1084, %v1025
  %1094 = vst.msk [vmem:[%s7 + $0x48] sm:$0xff] %vm1084, %v1027
  %1095 = vst.msk [vmem:[%s7 + $0x50] sm:$0xff] %vm1084, %v1030
  %1096 = vst.msk [vmem:[%s7 + $0x58] sm:$0xff] %vm1084, %v1032
  %1097 = vst.msk [vmem:[%s7 + $0x60] sm:$0xff] %vm1084, %v1035
  %1098 = vst.msk [vmem:[%s7 + $0x68] sm:$0xff] %vm1084, %v1037
  %1099 = vst.msk [vmem:[%s7 + $0x70] sm:$0xff] %vm1084, %v1040
  %1100 = vst.msk [vmem:[%s7 + $0x78] sm:$0xff] %vm1084, %v1042
  %1101 = vst.msk [vmem:[%s7 + $0x80] sm:$0xff] %vm1084, %v1045
  %1102 = vst.msk [vmem:[%s7 + $0x88] sm:$0xff] %vm1084, %v1047
  %1103 = vst.msk [vmem:[%s7 + $0x90] sm:$0xff] %vm1084, %v1050
  %1104 = vst.msk [vmem:[%s7 + $0x98] sm:$0xff] %vm1084, %v1052
  %1105 = vst.msk [vmem:[%s7 + $0xa0] sm:$0xff] %vm1084, %v1055
  %1106 = vst.msk [vmem:[%s7 + $0xa8] sm:$0xff] %vm1084, %v1057
  %1107 = vst.msk [vmem:[%s7 + $0xb0] sm:$0xff] %vm1084, %v1060
  %1108 = vst.msk [vmem:[%s7 + $0xb8] sm:$0xff] %vm1084, %v1062
  %1109 = vst.msk [vmem:[%s7 + $0xc0] sm:$0xff] %vm1084, %v1065
  %1110 = vst.msk [vmem:[%s7 + $0xc8] sm:$0xff] %vm1084, %v1067
  %1111 = vst.msk [vmem:[%s7 + $0xd0] sm:$0xff] %vm1084, %v1070
  %1112 = vst.msk [vmem:[%s7 + $0xd8] sm:$0xff] %vm1084, %v1072
  %1113 = vst.msk [vmem:[%s7 + $0xe0] sm:$0xff] %vm1084, %v1075
  %1114 = vst.msk [vmem:[%s7 + $0xe8] sm:$0xff] %vm1084, %v1077
  %1115 = vst.msk [vmem:[%s7 + $0xf0] sm:$0xff] %vm1084, %v1080
  %1116 = vst.msk [vmem:[%s7 + $0xf8] sm:$0xff] %vm1084, %v1082
  // Predicated region
  $region30: #{tpu_custom_call.1} parent=0 // pred_check
    _
  $region31: #{tpu_custom_call.1} parent=0 // pred_check_branch
    %1118 = sbr.rel (0) target = $region33
  $region32: #{tpu_custom_call.1} parent=0 // pred_region
    _
  $region33: #{tpu_custom_call.1} parent=0 // pred_fallthru
    _
  // Predicated region
  $region34: #{tpu_custom_call.1} parent=0 // pred_check
    _
  $region35: #{tpu_custom_call.1} parent=0 // pred_check_branch
    %1120 = sbr.rel (0) target = $region37
  $region36: #{tpu_custom_call.1} parent=0 // pred_region
    _
  $region37: #{tpu_custom_call.1} parent=0 // pred_fallthru
    _

</llo_original>
